<compile_context>
chip_gen: v5e
topology: v5e:2x2
jax: 0.10.0
libtpu: 0.0.40
codegen_flags: <defaults>
</compile_context>

<pallas_src>
import math

import jax
import jax.numpy as jnp
from jax.experimental import pallas as pl
from jax.experimental.pallas import tpu as pltpu

_LANES = 128
_TARGET_BLOCK_BYTES = 4 * 1024 * 1024   # ~4 MiB blocks (mem-bound sweet spot)
_VMEM_LIMIT_BYTES = 32 * 1024 * 1024    # 2 arrays x 2 bufs x 4 MiB = 16 MiB << 32 MiB


def _identity_kernel(x_ref, o_ref):
    # Whole-tile load/store; the BlockSpec pipeline (prefetch i+1 / writeback
    # i-1) does the real work.
    o_ref[...] = x_ref[...]


def _round_up(n: int, m: int) -> int:
    return ((n + m - 1) // m) * m


def _sublane_align(dtype) -> int:
    """Rows per packed vreg tile: 8 for 4-byte, 16 for 2-byte, 32 for 1-byte."""
    itemsize = jnp.dtype(dtype).itemsize
    packing = max(1, 4 // itemsize)
    return 8 * packing


def _balanced_tile(total_units: int, max_tile_units: int, align: int):
    """Tile size <= ~max that splits `total_units` into an even, near-equal
    number of blocks (keeps v7x's two TensorCores load-balanced)."""
    max_tile_units = max(align, (max_tile_units // align) * align)
    num_blocks = pl.cdiv(total_units, max_tile_units)
    if num_blocks > 1 and num_blocks % 2 == 1:
        num_blocks += 1
    tile = _round_up(pl.cdiv(total_units, num_blocks), align)
    tile = min(tile, _round_up(total_units, align))
    return tile, pl.cdiv(total_units, tile)


def base_model_forward(x: jax.Array, *, donate_input: bool = False) -> jax.Array:
    """Pass-through forward (identity), executed as a Pallas TPU copy kernel.

    Arbitrary rank / element count; returns a bit-exact tensor of identical
    shape and dtype.  With donate_input=True the kernel input buffer is aliased
    to the output (input_output_aliases={0: 0}); the caller must not reuse the
    donated value.
    """
    orig_shape = x.shape
    dtype = x.dtype
    n = x.size
    if n == 0:
        return x

    itemsize = jnp.dtype(dtype).itemsize
    align = _sublane_align(dtype)
    io_alias = {0: 0} if donate_input else {}
    compiler_params = pltpu.CompilerParams(
        dimension_semantics=("parallel",),       # 2-TC sharding on v7x
        vmem_limit_bytes=_VMEM_LIMIT_BYTES,      # safe headroom on v5e/v6e/v7x
    )

    if n % _LANES == 0:
        # Lane-aligned fast path: bitcast-style reshape to [rows, 128] (free
        # under jit), tile sublane rows in ~4 MiB balanced blocks.
        rows = n // _LANES
        x2d = x.reshape(rows, _LANES)
        max_tile_rows = max(align, _TARGET_BLOCK_BYTES // (_LANES * itemsize))
        tile_rows, nblk = _balanced_tile(rows, max_tile_rows, align)
        out = pl.pallas_call(
            _identity_kernel,
            out_shape=jax.ShapeDtypeStruct((rows, _LANES), dtype),
            grid=(nblk,),
            in_specs=[pl.BlockSpec((tile_rows, _LANES), lambda i: (i, 0))],
            out_specs=pl.BlockSpec((tile_rows, _LANES), lambda i: (i, 0)),
            input_output_aliases=io_alias,
            compiler_params=compiler_params,
        )(x2d)
        return out.reshape(orig_shape)

    # Non-128-divisible element count: flat 1-D copy, no pad/slice HBM passes.
    x1d = x.reshape(-1)
    unit = align * _LANES                         # 1024 / 2048 / 4096 elems
    max_tile_elems = max(unit, _TARGET_BLOCK_BYTES // itemsize)
    if n <= max_tile_elems:
        # Single block equal to the full array extent — no masking needed.
        tile_elems, nblk = n, 1
    else:
        # Packed-tile-aligned blocks; Pallas masks the ragged last block.
        tile_elems, nblk = _balanced_tile(n, max_tile_elems, unit)
    out = pl.pallas_call(
        _identity_kernel,
        out_shape=jax.ShapeDtypeStruct((n,), dtype),
        grid=(nblk,),
        in_specs=[pl.BlockSpec((tile_elems,), lambda i: (i,))],
        out_specs=pl.BlockSpec((tile_elems,), lambda i: (i,)),
        input_output_aliases=io_alias,
        compiler_params=compiler_params,
    )(x1d)
    return out.reshape(orig_shape)


def count_trainable_params() -> int:
    """Equivalent of BaseModel.summary(): sum of trainable parameter sizes.

    The base class registers no parameters, so this is 0.  Pure host-side math
    (no device dispatch).
    """
    params = []  # BaseModel.__init__ creates no nn.Parameter / submodules.
    return sum(math.prod(p_shape) for p_shape in params)


if __name__ == "__main__":
    key = jax.random.PRNGKey(0)
    forward = jax.jit(base_model_forward, static_argnames=("donate_input",))

    # NCHW-style input consistent with a conv-model config: [B=2, C=4, H=16, W=16].
    x = jax.random.normal(key, (2, 4, 16, 16), dtype=jnp.float32)
    y = jax.block_until_ready(forward(x, donate_input=False))
    assert y.shape == x.shape and y.dtype == x.dtype
    assert bool(jnp.all(y == x))

    # bf16 input: exercises the packed (16, 128) sublane alignment path.
    x_bf16 = x.astype(jnp.bfloat16)
    y_bf16 = jax.block_until_ready(forward(x_bf16, donate_input=False))
    assert y_bf16.dtype == jnp.bfloat16
    assert bool(jnp.all(y_bf16 == x_bf16))

    # Non-128-divisible / non-8-aligned element count (105 elems): 1-D
    # full-extent block, no pad / slice round trips.
    x_odd = jax.random.normal(key, (3, 5, 7), dtype=jnp.float32)
    y_odd = jax.block_until_ready(forward(x_odd, donate_input=False))
    assert y_odd.shape == x_odd.shape and y_odd.dtype == x_odd.dtype
    assert bool(jnp.all(y_odd == x_odd))

    # Donated-input variant: output aliases the kernel input buffer
    # (input_output_aliases={0: 0}); the donated temporary is not used again.
    x_tmp = x + 1.0
    y_alias = jax.block_until_ready(forward(x_tmp, donate_input=True))
    del x_tmp
    assert bool(jnp.all(y_alias == x + 1.0))

    # summary() equivalent: the base class has no trainable parameters.
    assert count_trainable_params() == 0

    print("KERNEL_OK")
</pallas_src>

<mosaic_0001>
module attributes {stable_mosaic.version = 11 : i64} {
  func.func @_identity_kernel(%arg0: i32, %arg1: memref<16x128xf32, #tpu.memory_space<vmem>>, %arg2: memref<16x128xf32, #tpu.memory_space<vmem>>) attributes {dimension_semantics = [#tpu.dimension_semantics<parallel>], iteration_bounds = array<i64: 1>, scalar_prefetch = 0 : i64, scratch_operands = 0 : i64, tpu.core_type = #tpu.core_type<tc>, window_params = [{transform_indices = @transform_0, window_bounds = array<i64: 16, 128>}, {transform_indices = @transform_1, window_bounds = array<i64: 16, 128>}]} {
    %c0 = arith.constant 0 : index
    %c0_0 = arith.constant 0 : index
    %0 = vector.load %arg1[%c0, %c0_0] : memref<16x128xf32, #tpu.memory_space<vmem>>, vector<16x128xf32>
    %c0_1 = arith.constant 0 : index
    %c0_2 = arith.constant 0 : index
    %1 = vector.load %arg2[%c0_1, %c0_2] : memref<16x128xf32, #tpu.memory_space<vmem>>, vector<16x128xf32>
    tpu.vector_store %arg2[%c0_1, %c0_2], %0 {strides = array<i32>} : memref<16x128xf32, #tpu.memory_space<vmem>>, vector<16x128xf32>,
    return
  }
  func.func @transform_0(%arg0: i32) -> (i32, i32) {
    %c0_i32 = arith.constant 0 : i32
    %c0_i32_0 = arith.constant 0 : i32
    return %arg0, %c0_i32 : i32, i32
  }
  func.func @transform_1(%arg0: i32) -> (i32, i32) {
    %c0_i32 = arith.constant 0 : i32
    %c0_i32_0 = arith.constant 0 : i32
    return %arg0, %c0_i32 : i32, i32
  }
}

</mosaic_0001>

<llo_original>
// kernel: base_model_forward.1
$region0: #{base_model_forward.1}
  #allocation0 [shape = 'u32[]', space=smem, size = 0x4, offset = 0x4, fixed_abs, tag = 'smem constant byte address 0x4 - core index']
  #allocation1 [shape = 'u32[72,128]{1,0:T(1,128)}', space=vmem, size = 0x9000, scoped, tag = 'internal scratch']
  %s0 = inlined_call_operand.vmem [shape: f32[16,128], index: 0, kind: input, shape index: {}]
  %s1 = inlined_call_operand.vmem [shape: f32[16,128], index: 1, kind: output, shape index: {}]
  %s2 = sld [smem:[#allocation0]]
  $region14: #{base_model_forward.1} parent=0
    _
  %s4 = ssub.s32 1, %s2
  %s5 = scalar_select 0, %s4, %s2
  // Predicated region
  $region2: #{base_model_forward.1} parent=0 // pred_check
    _
  $region3: #{base_model_forward.1} parent=0 // pred_check_branch
    %7 = sbr.rel (0) target = $region5
  $region4: #{base_model_forward.1} parent=0 // pred_region
    _
  $region5: #{base_model_forward.1} parent=0 // pred_fallthru
    _
  %v8 = vld [vmem:[%s0] sm:$0xff]
  %v9 = vld [vmem:[%s0 + $0x8] sm:$0xff]
  %10 = vst [vmem:[%s1] sm:$0xff] %v8
  %11 = vst [vmem:[%s1 + $0x8] sm:$0xff] %v9
  // Predicated region
  $region6: #{base_model_forward.1} parent=0 // pred_check
    _
  $region7: #{base_model_forward.1} parent=0 // pred_check_branch
    %13 = sbr.rel (0) target = $region9
  $region8: #{base_model_forward.1} parent=0 // pred_region
    _
  $region9: #{base_model_forward.1} parent=0 // pred_fallthru
    _
  // Predicated region
  $region10: #{base_model_forward.1} parent=0 // pred_check
    _
  $region11: #{base_model_forward.1} parent=0 // pred_check_branch
    %15 = sbr.rel (0) target = $region13
  $region12: #{base_model_forward.1} parent=0 // pred_region
    _
  $region13: #{base_model_forward.1} parent=0 // pred_fallthru
    _

</llo_original>
